<compile_context>
chip_gen: v7x
topology: tpu7x:2x2x1
jax: 0.10.0
libtpu: 0.0.40
codegen_flags: <defaults>
</compile_context>

<pallas_src>
import functools
import math

import jax
import jax.numpy as jnp
import numpy as np
from jax.experimental import pallas as pl
from jax.experimental.pallas import tpu as pltpu

EPS = 1e-5                      # nn.BatchNorm2d default
LANE = 128                      # lane width
TILE_M = 256                    # rows per grid step (multiple of 8; raise to
                                # 512-1024 for real ResNet sizes / per-chip VMEM)
VMEM_LIMIT = 32 * 1024 * 1024   # safe on v5e/v6e/v7x, far above what we need


def _round_up(x, m):
    return (x + m - 1) // m * m


# ----------------------------- Pallas kernels ------------------------------

def _matmul_stats_kernel(p_ref, w_ref, y_ref, sum_ref, sq_ref):
    """y = patches @ W (bf16 in, f32 acc); accumulate per-channel sum/sumsq."""
    i = pl.program_id(0)

    @pl.when(i == 0)
    def _():
        sum_ref[...] = jnp.zeros_like(sum_ref)
        sq_ref[...] = jnp.zeros_like(sq_ref)

    y = jnp.dot(p_ref[...], w_ref[...], preferred_element_type=jnp.float32)
    y_ref[...] = y
    sum_ref[...] += jnp.sum(y, axis=0, keepdims=True)
    sq_ref[...] += jnp.sum(y * y, axis=0, keepdims=True)


def _scale_shift_kernel(y_ref, a_ref, c_ref, o_ref, *, relu):
    """out = y * a + c  (folded BN affine), optional ReLU."""
    out = y_ref[...] * a_ref[...] + c_ref[...]
    if relu:
        out = jnp.maximum(out, 0.0)
    o_ref[...] = out


def _scale_shift_add_relu_kernel(y_ref, s_ref, a_ref, c_ref, sa_ref, sc_ref,
                                 o_ref):
    """out = relu( (y*a + c) + (s*sa + sc) )  -- BN2 + shortcut BN + add + ReLU."""
    out = y_ref[...] * a_ref[...] + c_ref[...]
    out = out + s_ref[...] * sa_ref[...] + sc_ref[...]
    o_ref[...] = jnp.maximum(out, 0.0)


# --------------------------- pallas_call wrappers ---------------------------

def conv_matmul_stats(patches, w_mat, m_true, tile_m):
    """patches:(Mpad,Kpad) bf16, w:(Kpad,Cpad) bf16 -> (y f32, mean, var)."""
    Mpad, Kpad = patches.shape
    Cpad = w_mat.shape[1]
    grid = (Mpad // tile_m,)

    y, s, sq = pl.pallas_call(
        _matmul_stats_kernel,
        out_shape=(jax.ShapeDtypeStruct((Mpad, Cpad), jnp.float32),
                   jax.ShapeDtypeStruct((1, Cpad), jnp.float32),
                   jax.ShapeDtypeStruct((1, Cpad), jnp.float32)),
        grid_spec=pltpu.PrefetchScalarGridSpec(
            num_scalar_prefetch=0, grid=grid,
            in_specs=[pl.BlockSpec((tile_m, Kpad), lambda i: (i, 0)),
                      pl.BlockSpec((Kpad, Cpad), lambda i: (0, 0))],  # resident
            out_specs=(pl.BlockSpec((tile_m, Cpad), lambda i: (i, 0)),
                       pl.BlockSpec((1, Cpad), lambda i: (0, 0)),     # resident acc
                       pl.BlockSpec((1, Cpad), lambda i: (0, 0)))),   # resident acc
        compiler_params=pltpu.CompilerParams(
            dimension_semantics=("arbitrary",),       # stats reduction over M
            vmem_limit_bytes=VMEM_LIMIT),
        cost_estimate=pl.CostEstimate(
            flops=2 * Mpad * Kpad * Cpad + 3 * Mpad * Cpad,
            transcendentals=0,
            bytes_accessed=(Mpad * Kpad * 2 + Kpad * Cpad * 2
                            + Mpad * Cpad * 4 + 2 * Cpad * 4)),
    )(patches, w_mat)

    m = jnp.float32(m_true)
    mean = s / m
    var = jnp.maximum(sq / m - mean * mean, 0.0)
    return y, mean, var


def bn_affine(mean, var, gamma, beta):
    """Fold BN into per-channel (a, c):  bn(y) = y*a + c."""
    a = gamma * jax.lax.rsqrt(var + EPS)
    c = beta - mean * a
    return a, c


def scale_shift(y, a, c, *, relu, tile_m):
    Mpad, Cpad = y.shape
    kern = functools.partial(_scale_shift_kernel, relu=relu)
    return pl.pallas_call(
        kern,
        out_shape=jax.ShapeDtypeStruct((Mpad, Cpad), jnp.float32),
        grid_spec=pltpu.PrefetchScalarGridSpec(
            num_scalar_prefetch=0, grid=(Mpad // tile_m,),
            in_specs=[pl.BlockSpec((tile_m, Cpad), lambda i: (i, 0)),
                      pl.BlockSpec((1, Cpad), lambda i: (0, 0)),
                      pl.BlockSpec((1, Cpad), lambda i: (0, 0))],
            out_specs=pl.BlockSpec((tile_m, Cpad), lambda i: (i, 0))),
        compiler_params=pltpu.CompilerParams(
            dimension_semantics=("parallel",), vmem_limit_bytes=VMEM_LIMIT),
        cost_estimate=pl.CostEstimate(
            flops=3 * Mpad * Cpad, transcendentals=0,
            bytes_accessed=2 * Mpad * Cpad * 4 + 2 * Cpad * 4),
    )(y, a, c)


def scale_shift_add_relu(y, s, a, c, sa, sc, *, tile_m):
    Mpad, Cpad = y.shape
    return pl.pallas_call(
        _scale_shift_add_relu_kernel,
        out_shape=jax.ShapeDtypeStruct((Mpad, Cpad), jnp.float32),
        grid_spec=pltpu.PrefetchScalarGridSpec(
            num_scalar_prefetch=0, grid=(Mpad // tile_m,),
            in_specs=[pl.BlockSpec((tile_m, Cpad), lambda i: (i, 0)),
                      pl.BlockSpec((tile_m, Cpad), lambda i: (i, 0)),
                      pl.BlockSpec((1, Cpad), lambda i: (0, 0)),
                      pl.BlockSpec((1, Cpad), lambda i: (0, 0)),
                      pl.BlockSpec((1, Cpad), lambda i: (0, 0)),
                      pl.BlockSpec((1, Cpad), lambda i: (0, 0))],
            out_specs=pl.BlockSpec((tile_m, Cpad), lambda i: (i, 0))),
        compiler_params=pltpu.CompilerParams(
            dimension_semantics=("parallel",), vmem_limit_bytes=VMEM_LIMIT),
        cost_estimate=pl.CostEstimate(
            flops=6 * Mpad * Cpad, transcendentals=0,
            bytes_accessed=3 * Mpad * Cpad * 4 + 4 * Cpad * 4),
    )(y, s, a, c, sa, sc)


# ------------------------------ JAX glue ------------------------------------

def im2col(x_nhwc, kh, kw, stride, pad):
    """Extract conv patches.  Returns ((M, kh*kw*Cin), (N, Ho, Wo))."""
    N, H, W, C = x_nhwc.shape
    xp = jnp.pad(x_nhwc, ((0, 0), (pad, pad), (pad, pad), (0, 0)))
    Ho = (H + 2 * pad - kh) // stride + 1
    Wo = (W + 2 * pad - kw) // stride + 1
    cols = []
    for ky in range(kh):
        for kx in range(kw):
            cols.append(xp[:, ky:ky + stride * Ho:stride,
                           kx:kx + stride * Wo:stride, :])
    p = jnp.concatenate(cols, axis=-1)           # (N, Ho, Wo, kh*kw*C)
    return p.reshape(N * Ho * Wo, kh * kw * C), (N, Ho, Wo)


def _pad2(x, rows, cols):
    return jnp.pad(x, ((0, rows - x.shape[0]), (0, cols - x.shape[1])))


def init_simple_block_params(key, indim, outdim, half_res):
    """Matches init_layer: conv ~ N(0, sqrt(2/(kh*kw*Cout))), BN gamma=1, beta=0."""
    k1, k2, k3 = jax.random.split(key, 3)
    std3 = math.sqrt(2.0 / float(3 * 3 * outdim))
    params = dict(
        W1=std3 * jax.random.normal(k1, (outdim, indim, 3, 3), jnp.float32),
        W2=std3 * jax.random.normal(k2, (outdim, outdim, 3, 3), jnp.float32),
        g1=jnp.ones((1, outdim), jnp.float32), b1=jnp.zeros((1, outdim), jnp.float32),
        g2=jnp.ones((1, outdim), jnp.float32), b2=jnp.zeros((1, outdim), jnp.float32),
    )
    if indim != outdim:
        std1 = math.sqrt(2.0 / float(1 * 1 * outdim))
        params.update(
            Ws=std1 * jax.random.normal(k3, (outdim, indim, 1, 1), jnp.float32),
            gs=jnp.ones((1, outdim), jnp.float32),
            bs=jnp.zeros((1, outdim), jnp.float32),
        )
    return params


def prepack_params(params, outdim):
    """One-time prepack: torch OIHW -> padded (Kpad, Cpad) bf16 matmul layout,
    gamma/beta -> padded (1, Cpad) f32.  Done OUTSIDE the per-forward hot path."""
    Cpad = _round_up(outdim, LANE)

    def prep_w(w):
        Cout, Cin, kh, kw = w.shape
        K = kh * kw * Cin
        wm = jnp.transpose(w, (2, 3, 1, 0)).reshape(K, Cout)
        return _pad2(wm, _round_up(K, LANE), Cpad).astype(jnp.bfloat16)

    def prep_v(v):
        return _pad2(v.astype(jnp.float32), 1, Cpad)

    pp = dict(W1=prep_w(params["W1"]), W2=prep_w(params["W2"]),
              g1=prep_v(params["g1"]), b1=prep_v(params["b1"]),
              g2=prep_v(params["g2"]), b2=prep_v(params["b2"]))
    if "Ws" in params:
        pp.update(Ws=prep_w(params["Ws"]),
                  gs=prep_v(params["gs"]), bs=prep_v(params["bs"]))
    return pp


def simple_block_forward(x_nchw, pp, *, indim, outdim, half_res,
                         tile_m=TILE_M):
    # Identity shortcut is only valid at stride 1 (same assumption as PyTorch).
    assert not (indim == outdim and half_res), \
        "identity shortcut requires stride 1 (indim == outdim => half_res False)"

    x = jnp.transpose(x_nchw, (0, 2, 3, 1))                   # NCHW -> NHWC
    s1 = 2 if half_res else 1
    Cpad = _round_up(outdim, LANE)

    # ---- C1 -> BN1 -> ReLU -------------------------------------------------
    p1, (N, Ho, Wo) = im2col(x, 3, 3, s1, 1)
    M = N * Ho * Wo
    tm = min(tile_m, _round_up(M, 8))
    Mpad = _round_up(M, tm)
    p1p = _pad2(p1, Mpad, _round_up(p1.shape[1], LANE)).astype(jnp.bfloat16)

    y1, mean1, var1 = conv_matmul_stats(p1p, pp["W1"], M, tm)
    a1, c1 = bn_affine(mean1, var1, pp["g1"], pp["b1"])
    out1 = scale_shift(y1, a1, c1, relu=True, tile_m=tm)       # (Mpad, Cpad)
    out1_nhwc = out1[:M, :outdim].reshape(N, Ho, Wo, outdim)

    # ---- shortcut ------------------------------------------------------------
    if indim != outdim:
        ps, _ = im2col(x, 1, 1, s1, 0)
        psp = _pad2(ps, Mpad, _round_up(ps.shape[1], LANE)).astype(jnp.bfloat16)
        s_pad, means, vars_ = conv_matmul_stats(psp, pp["Ws"], M, tm)
        sa, sc = bn_affine(means, vars_, pp["gs"], pp["bs"])   # BN folded into final kernel
    else:
        s_flat = x.reshape(-1, indim)                          # identity (stride 1)
        s_pad = _pad2(s_flat.astype(jnp.float32), Mpad, Cpad)
        sa = jnp.ones((1, Cpad), jnp.float32)
        sc = jnp.zeros((1, Cpad), jnp.float32)

    # ---- C2 -> BN2, residual add, ReLU (fused normalize) ---------------------
    p2, _ = im2col(out1_nhwc, 3, 3, 1, 1)
    p2p = _pad2(p2, Mpad, _round_up(p2.shape[1], LANE)).astype(jnp.bfloat16)
    y2, mean2, var2 = conv_matmul_stats(p2p, pp["W2"], M, tm)
    a2, c2 = bn_affine(mean2, var2, pp["g2"], pp["b2"])
    out = scale_shift_add_relu(y2, s_pad, a2, c2, sa, sc, tile_m=tm)

    out_nhwc = out[:M, :outdim].reshape(N, Ho, Wo, outdim)
    return jnp.transpose(out_nhwc, (0, 3, 1, 2))               # NHWC -> NCHW


# --------------------------- pure-JAX reference -----------------------------

def _ref_forward(x_nchw, params, indim, outdim, half_res):
    def conv(x, w, stride, pad):
        return jax.lax.conv_general_dilated(
            x, w, (stride, stride), [(pad, pad), (pad, pad)],
            dimension_numbers=("NCHW", "OIHW", "NCHW"))

    def bn(y, g, b):
        mean = y.mean(axis=(0, 2, 3), keepdims=True)
        var = ((y - mean) ** 2).mean(axis=(0, 2, 3), keepdims=True)
        return ((y - mean) * jax.lax.rsqrt(var + EPS)
                * g.reshape(1, -1, 1, 1) + b.reshape(1, -1, 1, 1))

    s1 = 2 if half_res else 1
    out = jnp.maximum(bn(conv(x_nchw, params["W1"], s1, 1),
                         params["g1"], params["b1"]), 0.0)
    out = bn(conv(out, params["W2"], 1, 1), params["g2"], params["b2"])
    if indim != outdim:
        short = bn(conv(x_nchw, params["Ws"], s1, 0), params["gs"], params["bs"])
    else:
        short = x_nchw
    return jnp.maximum(out + short, 0.0)


# --------------------------------- main --------------------------------------

if __name__ == "__main__":
    key = jax.random.PRNGKey(0)
    kx, kp1, kp2 = jax.random.split(key, 3)
    x = jax.random.normal(kx, (2, 4, 16, 16), jnp.float32)

    # bf16 MXU inputs vs f32 reference -> use a bf16-appropriate tolerance.
    ATOL = RTOL = 2e-2

    # Case 1: indim != outdim, half_res=True  (1x1-conv shortcut, stride 2)
    params1 = init_simple_block_params(kp1, indim=4, outdim=8, half_res=True)
    pp1 = prepack_params(params1, outdim=8)                      # one-time prepack
    fwd1 = jax.jit(functools.partial(simple_block_forward,
                                     indim=4, outdim=8, half_res=True))
    y1 = jax.block_until_ready(fwd1(x, pp1))
    assert y1.shape == (2, 8, 8, 8), y1.shape
    r1 = jax.block_until_ready(_ref_forward(x, params1, 4, 8, True))
    if not np.allclose(np.asarray(y1), np.asarray(r1), atol=ATOL, rtol=RTOL):
        raise AssertionError("case1 mismatch vs reference")

    # Case 2: indim == outdim, half_res=False (identity shortcut, multi-tile grid)
    params2 = init_simple_block_params(kp2, indim=4, outdim=4, half_res=False)
    pp2 = prepack_params(params2, outdim=4)
    fwd2 = jax.jit(functools.partial(simple_block_forward,
                                     indim=4, outdim=4, half_res=False))
    y2 = jax.block_until_ready(fwd2(x, pp2))
    assert y2.shape == (2, 4, 16, 16), y2.shape
    r2 = jax.block_until_ready(_ref_forward(x, params2, 4, 4, False))
    if not np.allclose(np.asarray(y2), np.asarray(r2), atol=ATOL, rtol=RTOL):
        raise AssertionError("case2 mismatch vs reference")

    print("KERNEL_OK")
</pallas_src>

<mosaic_0001>
module attributes {stable_mosaic.version = 11 : i64} {
  func.func @_matmul_stats_kernel(%arg0: i32, %arg1: memref<128x128xbf16, #tpu.memory_space<vmem>>, %arg2: memref<128x128xbf16, #tpu.memory_space<vmem>>, %arg3: memref<128x128xf32, #tpu.memory_space<vmem>>, %arg4: memref<1x128xf32, #tpu.memory_space<vmem>>, %arg5: memref<1x128xf32, #tpu.memory_space<vmem>>) attributes {dimension_semantics = [#tpu.dimension_semantics<arbitrary>], iteration_bounds = array<i64: 1>, scalar_prefetch = 0 : i64, scratch_operands = 0 : i64, tpu.core_type = #tpu.core_type<tc>, window_params = [{transform_indices = @transform_0, window_bounds = array<i64: 128, 128>}, {pipeline_mode = #tpu.pipeline_mode<synchronous>, transform_indices = @transform_1, window_bounds = array<i64: 128, 128>}, {transform_indices = @transform_2, window_bounds = array<i64: 128, 128>}, {pipeline_mode = #tpu.pipeline_mode<synchronous>, transform_indices = @transform_3, window_bounds = array<i64: 1, 128>}, {pipeline_mode = #tpu.pipeline_mode<synchronous>, transform_indices = @transform_4, window_bounds = array<i64: 1, 128>}]} {
    %c0_i32 = arith.constant 0 : i32
    %0 = arith.cmpi eq, %arg0, %c0_i32 : i32
    %1 = arith.extui %0 : i1 to i32
    %c0_i32_0 = arith.constant 0 : i32
    %2 = arith.cmpi ne, %1, %c0_i32_0 : i32
    scf.if %2 {
      %cst_16 = arith.constant 0.000000e+00 : f32
      %18 = vector.broadcast %cst_16 : f32 to vector<1x128xf32>
      %c0_17 = arith.constant 0 : index
      %c0_18 = arith.constant 0 : index
      %19 = vector.load %arg4[%c0_17, %c0_18] : memref<1x128xf32, #tpu.memory_space<vmem>>, vector<1x128xf32>
      tpu.vector_store %arg4[%c0_17, %c0_18], %18 {strides = array<i32>} : memref<1x128xf32, #tpu.memory_space<vmem>>, vector<1x128xf32>,
      %cst_19 = arith.constant 0.000000e+00 : f32
      %20 = vector.broadcast %cst_19 : f32 to vector<1x128xf32>
      %c0_20 = arith.constant 0 : index
      %c0_21 = arith.constant 0 : index
      %21 = vector.load %arg5[%c0_20, %c0_21] : memref<1x128xf32, #tpu.memory_space<vmem>>, vector<1x128xf32>
      tpu.vector_store %arg5[%c0_20, %c0_21], %20 {strides = array<i32>} : memref<1x128xf32, #tpu.memory_space<vmem>>, vector<1x128xf32>,
    } else {
    }
    %c0 = arith.constant 0 : index
    %c0_1 = arith.constant 0 : index
    %3 = vector.load %arg1[%c0, %c0_1] : memref<128x128xbf16, #tpu.memory_space<vmem>>, vector<128x128xbf16>
    %c0_2 = arith.constant 0 : index
    %c0_3 = arith.constant 0 : index
    %4 = vector.load %arg2[%c0_2, %c0_3] : memref<128x128xbf16, #tpu.memory_space<vmem>>, vector<128x128xbf16>
    %cst = arith.constant dense<0.000000e+00> : vector<128x128xf32>
    %5 = tpu.matmul %3, %4, %cst {dimension_numbers = #tpu.dot_dimension_numbers<[1], [0], [0], [1], [0, 0, 1, 1], [], []>} : vector<128x128xbf16>, vector<128x128xbf16>, vector<128x128xf32> -> vector<128x128xf32>
    %c0_4 = arith.constant 0 : index
    %c0_5 = arith.constant 0 : index
    %6 = vector.load %arg3[%c0_4, %c0_5] : memref<128x128xf32, #tpu.memory_space<vmem>>, vector<128x128xf32>
    tpu.vector_store %arg3[%c0_4, %c0_5], %5 {strides = array<i32>} : memref<128x128xf32, #tpu.memory_space<vmem>>, vector<128x128xf32>,
    %c0_6 = arith.constant 0 : index
    %c0_7 = arith.constant 0 : index
    %7 = vector.load %arg4[%c0_6, %c0_7] : memref<1x128xf32, #tpu.memory_space<vmem>>, vector<1x128xf32>
    %cst_8 = arith.constant dense<0.000000e+00> : vector<128xf32>
    %8 = vector.multi_reduction <add>, %5, %cst_8 [0] : vector<128x128xf32> to vector<128xf32>
    %9 = vector.shape_cast %8 : vector<128xf32> to vector<1x128xf32>
    %10 = arith.addf %7, %9 : vector<1x128xf32>
    %c0_9 = arith.constant 0 : index
    %c0_10 = arith.constant 0 : index
    %11 = vector.load %arg4[%c0_9, %c0_10] : memref<1x128xf32, #tpu.memory_space<vmem>>, vector<1x128xf32>
    tpu.vector_store %arg4[%c0_9, %c0_10], %10 {strides = array<i32>} : memref<1x128xf32, #tpu.memory_space<vmem>>, vector<1x128xf32>,
    %c0_11 = arith.constant 0 : index
    %c0_12 = arith.constant 0 : index
    %12 = vector.load %arg5[%c0_11, %c0_12] : memref<1x128xf32, #tpu.memory_space<vmem>>, vector<1x128xf32>
    %13 = arith.mulf %5, %5 : vector<128x128xf32>
    %cst_13 = arith.constant dense<0.000000e+00> : vector<128xf32>
    %14 = vector.multi_reduction <add>, %13, %cst_13 [0] : vector<128x128xf32> to vector<128xf32>
    %15 = vector.shape_cast %14 : vector<128xf32> to vector<1x128xf32>
    %16 = arith.addf %12, %15 : vector<1x128xf32>
    %c0_14 = arith.constant 0 : index
    %c0_15 = arith.constant 0 : index
    %17 = vector.load %arg5[%c0_14, %c0_15] : memref<1x128xf32, #tpu.memory_space<vmem>>, vector<1x128xf32>
    tpu.vector_store %arg5[%c0_14, %c0_15], %16 {strides = array<i32>} : memref<1x128xf32, #tpu.memory_space<vmem>>, vector<1x128xf32>,
    return
  }
  func.func @transform_0(%arg0: i32) -> (i32, i32) {
    %c0_i32 = arith.constant 0 : i32
    %c0_i32_0 = arith.constant 0 : i32
    return %arg0, %c0_i32 : i32, i32
  }
  func.func @transform_1(%arg0: i32) -> (i32, i32) {
    %c0_i32 = arith.constant 0 : i32
    %c0_i32_0 = arith.constant 0 : i32
    %c0_i32_1 = arith.constant 0 : i32
    return %c0_i32, %c0_i32_0 : i32, i32
  }
  func.func @transform_2(%arg0: i32) -> (i32, i32) {
    %c0_i32 = arith.constant 0 : i32
    %c0_i32_0 = arith.constant 0 : i32
    return %arg0, %c0_i32 : i32, i32
  }
  func.func @transform_3(%arg0: i32) -> (i32, i32) {
    %c0_i32 = arith.constant 0 : i32
    %c0_i32_0 = arith.constant 0 : i32
    %c0_i32_1 = arith.constant 0 : i32
    return %c0_i32, %c0_i32_0 : i32, i32
  }
  func.func @transform_4(%arg0: i32) -> (i32, i32) {
    %c0_i32 = arith.constant 0 : i32
    %c0_i32_0 = arith.constant 0 : i32
    %c0_i32_1 = arith.constant 0 : i32
    return %c0_i32, %c0_i32_0 : i32, i32
  }
}

module attributes {stable_mosaic.version = 11 : i64} {
  func.func @_scale_shift_kernel(%arg0: i32, %arg1: memref<128x128xf32, #tpu.memory_space<vmem>>, %arg2: memref<1x128xf32, #tpu.memory_space<vmem>>, %arg3: memref<1x128xf32, #tpu.memory_space<vmem>>, %arg4: memref<128x128xf32, #tpu.memory_space<vmem>>) attributes {dimension_semantics = [#tpu.dimension_semantics<parallel>], iteration_bounds = array<i64: 1>, scalar_prefetch = 0 : i64, scratch_operands = 0 : i64, tpu.core_type = #tpu.core_type<tc>, window_params = [{transform_indices = @transform_0, window_bounds = array<i64: 128, 128>}, {pipeline_mode = #tpu.pipeline_mode<synchronous>, transform_indices = @transform_1, window_bounds = array<i64: 1, 128>}, {pipeline_mode = #tpu.pipeline_mode<synchronous>, transform_indices = @transform_2, window_bounds = array<i64: 1, 128>}, {transform_indices = @transform_3, window_bounds = array<i64: 128, 128>}]} {
    %c0 = arith.constant 0 : index
    %c0_0 = arith.constant 0 : index
    %0 = vector.load %arg1[%c0, %c0_0] : memref<128x128xf32, #tpu.memory_space<vmem>>, vector<128x128xf32>
    %c0_1 = arith.constant 0 : index
    %c0_2 = arith.constant 0 : index
    %1 = vector.load %arg2[%c0_1, %c0_2] : memref<1x128xf32, #tpu.memory_space<vmem>>, vector<1x128xf32>
    %2 = vector.broadcast %1 : vector<1x128xf32> to vector<128x128xf32>
    %3 = arith.mulf %0, %2 : vector<128x128xf32>
    %c0_3 = arith.constant 0 : index
    %c0_4 = arith.constant 0 : index
    %4 = vector.load %arg3[%c0_3, %c0_4] : memref<1x128xf32, #tpu.memory_space<vmem>>, vector<1x128xf32>
    %5 = vector.broadcast %4 : vector<1x128xf32> to vector<128x128xf32>
    %6 = arith.addf %3, %5 : vector<128x128xf32>
    %cst = arith.constant 0.000000e+00 : f32
    %7 = vector.broadcast %cst : f32 to vector<128x128xf32>
    %8 = arith.maximumf %6, %7 : vector<128x128xf32>
    %c0_5 = arith.constant 0 : index
    %c0_6 = arith.constant 0 : index
    %9 = vector.load %arg4[%c0_5, %c0_6] : memref<128x128xf32, #tpu.memory_space<vmem>>, vector<128x128xf32>
    tpu.vector_store %arg4[%c0_5, %c0_6], %8 {strides = array<i32>} : memref<128x128xf32, #tpu.memory_space<vmem>>, vector<128x128xf32>,
    return
  }
  func.func @transform_0(%arg0: i32) -> (i32, i32) {
    %c0_i32 = arith.constant 0 : i32
    %c0_i32_0 = arith.constant 0 : i32
    return %arg0, %c0_i32 : i32, i32
  }
  func.func @transform_1(%arg0: i32) -> (i32, i32) {
    %c0_i32 = arith.constant 0 : i32
    %c0_i32_0 = arith.constant 0 : i32
    %c0_i32_1 = arith.constant 0 : i32
    return %c0_i32, %c0_i32_0 : i32, i32
  }
  func.func @transform_2(%arg0: i32) -> (i32, i32) {
    %c0_i32 = arith.constant 0 : i32
    %c0_i32_0 = arith.constant 0 : i32
    %c0_i32_1 = arith.constant 0 : i32
    return %c0_i32, %c0_i32_0 : i32, i32
  }
  func.func @transform_3(%arg0: i32) -> (i32, i32) {
    %c0_i32 = arith.constant 0 : i32
    %c0_i32_0 = arith.constant 0 : i32
    return %arg0, %c0_i32 : i32, i32
  }
}

module attributes {stable_mosaic.version = 11 : i64} {
  func.func @_scale_shift_add_relu_kernel(%arg0: i32, %arg1: memref<128x128xf32, #tpu.memory_space<vmem>>, %arg2: memref<128x128xf32, #tpu.memory_space<vmem>>, %arg3: memref<1x128xf32, #tpu.memory_space<vmem>>, %arg4: memref<1x128xf32, #tpu.memory_space<vmem>>, %arg5: memref<1x128xf32, #tpu.memory_space<vmem>>, %arg6: memref<1x128xf32, #tpu.memory_space<vmem>>, %arg7: memref<128x128xf32, #tpu.memory_space<vmem>>) attributes {dimension_semantics = [#tpu.dimension_semantics<parallel>], iteration_bounds = array<i64: 1>, scalar_prefetch = 0 : i64, scratch_operands = 0 : i64, tpu.core_type = #tpu.core_type<tc>, window_params = [{transform_indices = @transform_0, window_bounds = array<i64: 128, 128>}, {transform_indices = @transform_1, window_bounds = array<i64: 128, 128>}, {pipeline_mode = #tpu.pipeline_mode<synchronous>, transform_indices = @transform_2, window_bounds = array<i64: 1, 128>}, {pipeline_mode = #tpu.pipeline_mode<synchronous>, transform_indices = @transform_3, window_bounds = array<i64: 1, 128>}, {pipeline_mode = #tpu.pipeline_mode<synchronous>, transform_indices = @transform_4, window_bounds = array<i64: 1, 128>}, {pipeline_mode = #tpu.pipeline_mode<synchronous>, transform_indices = @transform_5, window_bounds = array<i64: 1, 128>}, {transform_indices = @transform_6, window_bounds = array<i64: 128, 128>}]} {
    %c0 = arith.constant 0 : index
    %c0_0 = arith.constant 0 : index
    %0 = vector.load %arg1[%c0, %c0_0] : memref<128x128xf32, #tpu.memory_space<vmem>>, vector<128x128xf32>
    %c0_1 = arith.constant 0 : index
    %c0_2 = arith.constant 0 : index
    %1 = vector.load %arg3[%c0_1, %c0_2] : memref<1x128xf32, #tpu.memory_space<vmem>>, vector<1x128xf32>
    %2 = vector.broadcast %1 : vector<1x128xf32> to vector<128x128xf32>
    %3 = arith.mulf %0, %2 : vector<128x128xf32>
    %c0_3 = arith.constant 0 : index
    %c0_4 = arith.constant 0 : index
    %4 = vector.load %arg4[%c0_3, %c0_4] : memref<1x128xf32, #tpu.memory_space<vmem>>, vector<1x128xf32>
    %5 = vector.broadcast %4 : vector<1x128xf32> to vector<128x128xf32>
    %6 = arith.addf %3, %5 : vector<128x128xf32>
    %c0_5 = arith.constant 0 : index
    %c0_6 = arith.constant 0 : index
    %7 = vector.load %arg2[%c0_5, %c0_6] : memref<128x128xf32, #tpu.memory_space<vmem>>, vector<128x128xf32>
    %c0_7 = arith.constant 0 : index
    %c0_8 = arith.constant 0 : index
    %8 = vector.load %arg5[%c0_7, %c0_8] : memref<1x128xf32, #tpu.memory_space<vmem>>, vector<1x128xf32>
    %9 = vector.broadcast %8 : vector<1x128xf32> to vector<128x128xf32>
    %10 = arith.mulf %7, %9 : vector<128x128xf32>
    %11 = arith.addf %6, %10 : vector<128x128xf32>
    %c0_9 = arith.constant 0 : index
    %c0_10 = arith.constant 0 : index
    %12 = vector.load %arg6[%c0_9, %c0_10] : memref<1x128xf32, #tpu.memory_space<vmem>>, vector<1x128xf32>
    %13 = vector.broadcast %12 : vector<1x128xf32> to vector<128x128xf32>
    %14 = arith.addf %11, %13 : vector<128x128xf32>
    %cst = arith.constant 0.000000e+00 : f32
    %15 = vector.broadcast %cst : f32 to vector<128x128xf32>
    %16 = arith.maximumf %14, %15 : vector<128x128xf32>
    %c0_11 = arith.constant 0 : index
    %c0_12 = arith.constant 0 : index
    %17 = vector.load %arg7[%c0_11, %c0_12] : memref<128x128xf32, #tpu.memory_space<vmem>>, vector<128x128xf32>
    tpu.vector_store %arg7[%c0_11, %c0_12], %16 {strides = array<i32>} : memref<128x128xf32, #tpu.memory_space<vmem>>, vector<128x128xf32>,
    return
  }
  func.func @transform_0(%arg0: i32) -> (i32, i32) {
    %c0_i32 = arith.constant 0 : i32
    %c0_i32_0 = arith.constant 0 : i32
    return %arg0, %c0_i32 : i32, i32
  }
  func.func @transform_1(%arg0: i32) -> (i32, i32) {
    %c0_i32 = arith.constant 0 : i32
    %c0_i32_0 = arith.constant 0 : i32
    return %arg0, %c0_i32 : i32, i32
  }
  func.func @transform_2(%arg0: i32) -> (i32, i32) {
    %c0_i32 = arith.constant 0 : i32
    %c0_i32_0 = arith.constant 0 : i32
    %c0_i32_1 = arith.constant 0 : i32
    return %c0_i32, %c0_i32_0 : i32, i32
  }
  func.func @transform_3(%arg0: i32) -> (i32, i32) {
    %c0_i32 = arith.constant 0 : i32
    %c0_i32_0 = arith.constant 0 : i32
    %c0_i32_1 = arith.constant 0 : i32
    return %c0_i32, %c0_i32_0 : i32, i32
  }
  func.func @transform_4(%arg0: i32) -> (i32, i32) {
    %c0_i32 = arith.constant 0 : i32
    %c0_i32_0 = arith.constant 0 : i32
    %c0_i32_1 = arith.constant 0 : i32
    return %c0_i32, %c0_i32_0 : i32, i32
  }
  func.func @transform_5(%arg0: i32) -> (i32, i32) {
    %c0_i32 = arith.constant 0 : i32
    %c0_i32_0 = arith.constant 0 : i32
    %c0_i32_1 = arith.constant 0 : i32
    return %c0_i32, %c0_i32_0 : i32, i32
  }
  func.func @transform_6(%arg0: i32) -> (i32, i32) {
    %c0_i32 = arith.constant 0 : i32
    %c0_i32_0 = arith.constant 0 : i32
    return %arg0, %c0_i32 : i32, i32
  }
}

</mosaic_0001>

<llo_original>
// kernel: simple_block_forward.7
$region0: #{simple_block_forward.7}
  #allocation0 [shape = 'u32[]', space=smem, size = 0x4, offset = 0x4, fixed_abs, tag = 'smem constant byte address 0x4 - core index']
  #allocation1 [shape = 'u32[144,128]{1,0:T(1,128)}', space=vmem, size = 0x12000, scoped, tag = 'internal scratch']
  %s0 = inlined_call_operand.vmem [shape: bf16[128,128], index: 0, kind: input, shape index: {}]
  %s1 = inlined_call_operand.vmem [shape: bf16[128,128], index: 1, kind: input, shape index: {}]
  %s2 = inlined_call_operand.vmem [shape: f32[128,128], index: 2, kind: output, shape index: {0}]
  %s3 = inlined_call_operand.vmem [shape: f32[1,128], index: 3, kind: output, shape index: {1}]
  %s4 = inlined_call_operand.vmem [shape: f32[1,128], index: 4, kind: output, shape index: {2}]
  %5 = xla_tuple %s2, %s3, %s4
  %s6 = sld [smem:[#allocation0]]
  $region38: #{simple_block_forward.7} parent=0
    _
  %s8 = ssub.s32 1, %s6
  %s9 = scalar_select 0, %s8, %s6
  // Predicated region
  $region2: #{simple_block_forward.7} parent=0 // pred_check
    _
  $region3: #{simple_block_forward.7} parent=0 // pred_check_branch
    %11 = sbr.rel (0) target = $region5
  $region4: #{simple_block_forward.7} parent=0 // pred_region
    _
  $region5: #{simple_block_forward.7} parent=0 // pred_fallthru
    _
  // Predicated region
  $region6: #{simple_block_forward.7} parent=0 // pred_check
    _
  $region7: #{simple_block_forward.7} parent=0 // pred_check_branch
    %13 = sbr.rel (0) target = $region9
  $region8: #{simple_block_forward.7} parent=0 // pred_region
    _
  $region9: #{simple_block_forward.7} parent=0 // pred_fallthru
    _
  %p15 = scmp.eq.s32.totalorder 0, 0
  // Predicated region
  $region10: #{simple_block_forward.7} parent=0 // pred_check
    %p16 = pneg %p15
  $region11: #{simple_block_forward.7} parent=0 // pred_check_branch
    %18 = sbr.rel (%p16) target = $region13
  $region12: #{simple_block_forward.7} parent=0 // pred_region
    %19 = vst [vmem:[%s3] sm:$0x1] 0.0
    %20 = vst [vmem:[%s4] sm:$0x1] 0.0
  $region13: #{simple_block_forward.7} parent=0 // pred_fallthru
    _
  %v21 = vld [vmem:[%s0] sm:$0xf]
  %v22 = vld [vmem:[%s0 + $0x4] sm:$0xf]
  %v23 = vld [vmem:[%s0 + $0x8] sm:$0xf]
  %v24 = vld [vmem:[%s0 + $0xc] sm:$0xf]
  %v25 = vld [vmem:[%s0 + $0x10] sm:$0xf]
  %v26 = vld [vmem:[%s0 + $0x14] sm:$0xf]
  %v27 = vld [vmem:[%s0 + $0x18] sm:$0xf]
  %v28 = vld [vmem:[%s0 + $0x1c] sm:$0xf]
  %v29 = vld [vmem:[%s0 + $0x20] sm:$0xf]
  %v30 = vld [vmem:[%s0 + $0x24] sm:$0xf]
  %v31 = vld [vmem:[%s0 + $0x28] sm:$0xf]
  %v32 = vld [vmem:[%s0 + $0x2c] sm:$0xf]
  %v33 = vld [vmem:[%s0 + $0x30] sm:$0xf]
  %v34 = vld [vmem:[%s0 + $0x34] sm:$0xf]
  %v35 = vld [vmem:[%s0 + $0x38] sm:$0xf]
  %v36 = vld [vmem:[%s0 + $0x3c] sm:$0xf]
  %v37 = vld [vmem:[%s1] sm:$0xf]
  %v38 = vld [vmem:[%s1 + $0x4] sm:$0xf]
  %v39 = vld [vmem:[%s1 + $0x8] sm:$0xf]
  %v40 = vld [vmem:[%s1 + $0xc] sm:$0xf]
  %v41 = vld [vmem:[%s1 + $0x10] sm:$0xf]
  %v42 = vld [vmem:[%s1 + $0x14] sm:$0xf]
  %v43 = vld [vmem:[%s1 + $0x18] sm:$0xf]
  %v44 = vld [vmem:[%s1 + $0x1c] sm:$0xf]
  %v45 = vld [vmem:[%s1 + $0x20] sm:$0xf]
  %v46 = vld [vmem:[%s1 + $0x24] sm:$0xf]
  %v47 = vld [vmem:[%s1 + $0x28] sm:$0xf]
  %v48 = vld [vmem:[%s1 + $0x2c] sm:$0xf]
  %v49 = vld [vmem:[%s1 + $0x30] sm:$0xf]
  %v50 = vld [vmem:[%s1 + $0x34] sm:$0xf]
  %v51 = vld [vmem:[%s1 + $0x38] sm:$0xf]
  %v52 = vld [vmem:[%s1 + $0x3c] sm:$0xf]
  %v69 = vunpack.c.l.b16 %v21
  %v70 = vunpack.c.l.b16 %v22
  %v71 = vunpack.c.l.b16 %v23
  %v72 = vunpack.c.l.b16 %v24
  %v73 = vunpack.c.l.b16 %v25
  %v74 = vunpack.c.l.b16 %v26
  %v75 = vunpack.c.l.b16 %v27
  %v76 = vunpack.c.l.b16 %v28
  %v77 = vunpack.c.l.b16 %v29
  %v78 = vunpack.c.l.b16 %v30
  %v79 = vunpack.c.l.b16 %v31
  %v80 = vunpack.c.l.b16 %v32
  %v81 = vunpack.c.l.b16 %v33
  %v82 = vunpack.c.l.b16 %v34
  %v83 = vunpack.c.l.b16 %v35
  %v84 = vunpack.c.l.b16 %v36
  %v85 = vpack.c.b16 %v70, %v69
  %v86 = vpack.c.b16 %v72, %v71
  %v87 = vpack.c.b16 %v74, %v73
  %v88 = vpack.c.b16 %v76, %v75
  %v89 = vpack.c.b16 %v78, %v77
  %v90 = vpack.c.b16 %v80, %v79
  %v91 = vpack.c.b16 %v82, %v81
  %v92 = vpack.c.b16 %v84, %v83
  %v117 = vunpack.c.l.b16 %v37
  %v118 = vunpack.c.l.b16 %v38
  %v119 = vunpack.c.l.b16 %v39
  %v120 = vunpack.c.l.b16 %v40
  %v121 = vunpack.c.l.b16 %v41
  %v122 = vunpack.c.l.b16 %v42
  %v123 = vunpack.c.l.b16 %v43
  %v124 = vunpack.c.l.b16 %v44
  %v125 = vunpack.c.l.b16 %v45
  %v126 = vunpack.c.l.b16 %v46
  %v127 = vunpack.c.l.b16 %v47
  %v128 = vunpack.c.l.b16 %v48
  %v129 = vunpack.c.l.b16 %v49
  %v130 = vunpack.c.l.b16 %v50
  %v131 = vunpack.c.l.b16 %v51
  %v132 = vunpack.c.l.b16 %v52
  %v133 = vpack.c.b16 %v118, %v117
  %v134 = vpack.c.b16 %v120, %v119
  %v135 = vpack.c.b16 %v122, %v121
  %v136 = vpack.c.b16 %v124, %v123
  %v137 = vpack.c.b16 %v126, %v125
  %v138 = vpack.c.b16 %v128, %v127
  %v139 = vpack.c.b16 %v130, %v129
  %v140 = vpack.c.b16 %v132, %v131
  %149 = vmatprep.subr.bf16.mxu0 0
  %150 = vmatpush1.bf16.msra.mxu0 %v133
  %151 = vmatprep.subr.bf16.mxu0 0
  %152 = vmatpush1.bf16.msra.mxu0 %v134
  %153 = vmatprep.subr.bf16.mxu0 0
  %154 = vmatpush1.bf16.msra.mxu0 %v135
  %155 = vmatprep.subr.bf16.mxu0 0
  %156 = vmatpush1.bf16.msra.mxu0 %v136
  %157 = vmatprep.subr.bf16.mxu0 0
  %158 = vmatpush1.bf16.msra.mxu0 %v137
  %159 = vmatprep.subr.bf16.mxu0 0
  %160 = vmatpush1.bf16.msra.mxu0 %v138
  %161 = vmatprep.subr.bf16.mxu0 0
  %162 = vmatpush1.bf16.msra.mxu0 %v139
  %163 = vmatprep.subr.bf16.mxu0 0
  %164 = vmatpush1.bf16.msra.mxu0 %v140
  %165 = vmatprep.subr.bf16.mxu0 0
  %166 = vmatpush1.bf16.msra.mxu0 0
  %167 = vmatprep.subr.bf16.mxu0 0
  %168 = vmatpush1.bf16.msra.mxu0 0
  %169 = vmatprep.subr.bf16.mxu0 0
  %170 = vmatpush1.bf16.msra.mxu0 0
  %171 = vmatprep.subr.bf16.mxu0 0
  %172 = vmatpush1.bf16.msra.mxu0 0
  %173 = vmatprep.subr.bf16.mxu0 0
  %174 = vmatpush1.bf16.msra.mxu0 0
  %175 = vmatprep.subr.bf16.mxu0 0
  %176 = vmatpush1.bf16.msra.mxu0 0
  %177 = vmatprep.subr.bf16.mxu0 0
  %178 = vmatpush1.bf16.msra.mxu0 0
  %179 = vmatprep.subr.bf16.mxu0 0
  %180 = vmatpush1.bf16.msra.mxu0 0
  %181 = vmatprep.mubr.bf16.mxu0 0
  %182 = vmatmul.mubr.bf16.gmra.mrb[0].mxu0 %v85
  %v183 = vpop.f32.mrb[0].mxu0
  %v184 = vadd.f32 0.0, %v183
  %v185 = vpop.f32.mrb[0].mxu0
  %v186 = vpop.f32.mrb[0].mxu0
  %v187 = vadd.f32 0.0, %v186
  %v188 = vpop.f32.mrb[0].mxu0
  %189 = vmatprep.mubr.bf16.mxu0 0
  %190 = vmatmul.mubr.bf16.gmra.mrb[0].mxu0 %v86
  %v191 = vpop.f32.mrb[0].mxu0
  %v192 = vadd.f32 0.0, %v191
  %v193 = vpop.f32.mrb[0].mxu0
  %v194 = vpop.f32.mrb[0].mxu0
  %v195 = vadd.f32 0.0, %v194
  %v196 = vpop.f32.mrb[0].mxu0
  %197 = vmatprep.mubr.bf16.mxu0 0
  %198 = vmatmul.mubr.bf16.gmra.mrb[0].mxu0 %v87
  %v199 = vpop.f32.mrb[0].mxu0
  %v200 = vadd.f32 0.0, %v199
  %v201 = vpop.f32.mrb[0].mxu0
  %v202 = vpop.f32.mrb[0].mxu0
  %v203 = vadd.f32 0.0, %v202
  %v204 = vpop.f32.mrb[0].mxu0
  %205 = vmatprep.mubr.bf16.mxu0 0
  %206 = vmatmul.mubr.bf16.gmra.mrb[0].mxu0 %v88
  %v207 = vpop.f32.mrb[0].mxu0
  %v208 = vadd.f32 0.0, %v207
  %v209 = vpop.f32.mrb[0].mxu0
  %v210 = vpop.f32.mrb[0].mxu0
  %v211 = vadd.f32 0.0, %v210
  %v212 = vpop.f32.mrb[0].mxu0
  %213 = vmatprep.mubr.bf16.mxu0 0
  %214 = vmatmul.mubr.bf16.gmra.mrb[0].mxu0 %v89
  %v215 = vpop.f32.mrb[0].mxu0
  %v216 = vadd.f32 0.0, %v215
  %v217 = vpop.f32.mrb[0].mxu0
  %v218 = vpop.f32.mrb[0].mxu0
  %v219 = vadd.f32 0.0, %v218
  %v220 = vpop.f32.mrb[0].mxu0
  %221 = vmatprep.mubr.bf16.mxu0 0
  %222 = vmatmul.mubr.bf16.gmra.mrb[0].mxu0 %v90
  %v223 = vpop.f32.mrb[0].mxu0
  %v224 = vadd.f32 0.0, %v223
  %v225 = vpop.f32.mrb[0].mxu0
  %v226 = vpop.f32.mrb[0].mxu0
  %v227 = vadd.f32 0.0, %v226
  %v228 = vpop.f32.mrb[0].mxu0
  %229 = vmatprep.mubr.bf16.mxu0 0
  %230 = vmatmul.mubr.bf16.gmra.mrb[0].mxu0 %v91
  %v231 = vpop.f32.mrb[0].mxu0
  %v232 = vadd.f32 0.0, %v231
  %v233 = vpop.f32.mrb[0].mxu0
  %v234 = vpop.f32.mrb[0].mxu0
  %v235 = vadd.f32 0.0, %v234
  %v236 = vpop.f32.mrb[0].mxu0
  %237 = vmatprep.mubr.bf16.mxu0 0
  %238 = vmatmul.mubr.bf16.gmra.mrb[0].mxu0 %v92
  %v239 = vpop.f32.mrb[0].mxu0
  %v240 = vadd.f32 0.0, %v239
  %v241 = vpop.f32.mrb[0].mxu0
  %v242 = vpop.f32.mrb[0].mxu0
  %v243 = vadd.f32 0.0, %v242
  %v244 = vpop.f32.mrb[0].mxu0
  %245 = vdwg.mxu0
  %246 = vst [vmem:[%s2] sm:$0xff] %v184
  %247 = vst [vmem:[%s2 + $0x8] sm:$0xff] %v187
  %248 = vst [vmem:[%s2 + $0x10] sm:$0xff] %v192
  %249 = vst [vmem:[%s2 + $0x18] sm:$0xff] %v195
  %250 = vst [vmem:[%s2 + $0x20] sm:$0xff] %v200
  %251 = vst [vmem:[%s2 + $0x28] sm:$0xff] %v203
  %252 = vst [vmem:[%s2 + $0x30] sm:$0xff] %v208
  %253 = vst [vmem:[%s2 + $0x38] sm:$0xff] %v211
  %254 = vst [vmem:[%s2 + $0x40] sm:$0xff] %v216
  %255 = vst [vmem:[%s2 + $0x48] sm:$0xff] %v219
  %256 = vst [vmem:[%s2 + $0x50] sm:$0xff] %v224
  %257 = vst [vmem:[%s2 + $0x58] sm:$0xff] %v227
  %258 = vst [vmem:[%s2 + $0x60] sm:$0xff] %v232
  %259 = vst [vmem:[%s2 + $0x68] sm:$0xff] %v235
  %260 = vst [vmem:[%s2 + $0x70] sm:$0xff] %v240
  %261 = vst [vmem:[%s2 + $0x78] sm:$0xff] %v243
  %v262 = vld [vmem:[%s3] sm:$0x1]
  %v263 = vadd.f32 %v184, %v187
  %v264 = vadd.f32 %v263, %v192
  %v265 = vadd.f32 %v264, %v195
  %v266 = vadd.f32 %v265, %v200
  %v267 = vadd.f32 %v266, %v203
  %v268 = vadd.f32 %v267, %v208
  %v269 = vadd.f32 %v268, %v211
  %v270 = vadd.f32 %v269, %v216
  %v271 = vadd.f32 %v270, %v219
  %v272 = vadd.f32 %v271, %v224
  %v273 = vadd.f32 %v272, %v227
  %v274 = vadd.f32 %v273, %v232
  %v275 = vadd.f32 %v274, %v235
  %v276 = vadd.f32 %v275, %v240
  %v277 = vadd.f32 %v276, %v243
  %v278 = vrot.slane %v277, 4
  %v279 = vadd.f32 %v277, %v278
  %v280 = vrot.slane %v279, 2
  %v281 = vadd.f32 %v279, %v280
  %v282 = vrot.slane %v281, 1
  %v283 = vadd.f32 %v281, %v282
  %v284 = vadd.f32 %v262, %v283
  %285 = vst [vmem:[%s3] sm:$0x1] %v284
  %v286 = vld [vmem:[%s4] sm:$0x1]
  %v287 = vmul.f32 %v184, %v184
  %v288 = vmul.f32 %v187, %v187
  %v289 = vmul.f32 %v192, %v192
  %v290 = vmul.f32 %v195, %v195
  %v291 = vmul.f32 %v200, %v200
  %v292 = vmul.f32 %v203, %v203
  %v293 = vmul.f32 %v208, %v208
  %v294 = vmul.f32 %v211, %v211
  %v295 = vmul.f32 %v216, %v216
  %v296 = vmul.f32 %v219, %v219
  %v297 = vmul.f32 %v224, %v224
  %v298 = vmul.f32 %v227, %v227
  %v299 = vmul.f32 %v232, %v232
  %v300 = vmul.f32 %v235, %v235
  %v301 = vmul.f32 %v240, %v240
  %v302 = vmul.f32 %v243, %v243
  %v303 = vadd.f32 %v287, %v288
  %v304 = vadd.f32 %v303, %v289
  %v305 = vadd.f32 %v304, %v290
  %v306 = vadd.f32 %v305, %v291
  %v307 = vadd.f32 %v306, %v292
  %v308 = vadd.f32 %v307, %v293
  %v309 = vadd.f32 %v308, %v294
  %v310 = vadd.f32 %v309, %v295
  %v311 = vadd.f32 %v310, %v296
  %v312 = vadd.f32 %v311, %v297
  %v313 = vadd.f32 %v312, %v298
  %v314 = vadd.f32 %v313, %v299
  %v315 = vadd.f32 %v314, %v300
  %v316 = vadd.f32 %v315, %v301
  %v317 = vadd.f32 %v316, %v302
  %v318 = vrot.slane %v317, 4
  %v319 = vadd.f32 %v317, %v318
  %v320 = vrot.slane %v319, 2
  %v321 = vadd.f32 %v319, %v320
  %v322 = vrot.slane %v321, 1
  %v323 = vadd.f32 %v321, %v322
  %v324 = vadd.f32 %v286, %v323
  %325 = vst [vmem:[%s4] sm:$0x1] %v324
  // Predicated region
  $region14: #{simple_block_forward.7} parent=0 // pred_check
    _
  $region15: #{simple_block_forward.7} parent=0 // pred_check_branch
    %327 = sbr.rel (0) target = $region17
  $region16: #{simple_block_forward.7} parent=0 // pred_region
    _
  $region17: #{simple_block_forward.7} parent=0 // pred_fallthru
    _
  // Predicated region
  $region18: #{simple_block_forward.7} parent=0 // pred_check
    _
  $region19: #{simple_block_forward.7} parent=0 // pred_check_branch
    %329 = sbr.rel (0) target = $region21
  $region20: #{simple_block_forward.7} parent=0 // pred_region
    _
  $region21: #{simple_block_forward.7} parent=0 // pred_fallthru
    _
  // Predicated region
  $region22: #{simple_block_forward.7} parent=0 // pred_check
    _
  $region23: #{simple_block_forward.7} parent=0 // pred_check_branch
    %331 = sbr.rel (0) target = $region25
  $region24: #{simple_block_forward.7} parent=0 // pred_region
    _
  $region25: #{simple_block_forward.7} parent=0 // pred_fallthru
    _
  // Predicated region
  $region26: #{simple_block_forward.7} parent=0 // pred_check
    _
  $region27: #{simple_block_forward.7} parent=0 // pred_check_branch
    %333 = sbr.rel (0) target = $region29
  $region28: #{simple_block_forward.7} parent=0 // pred_region
    _
  $region29: #{simple_block_forward.7} parent=0 // pred_fallthru
    _
  // Predicated region
  $region30: #{simple_block_forward.7} parent=0 // pred_check
    _
  $region31: #{simple_block_forward.7} parent=0 // pred_check_branch
    %335 = sbr.rel (0) target = $region33
  $region32: #{simple_block_forward.7} parent=0 // pred_region
    _
  $region33: #{simple_block_forward.7} parent=0 // pred_fallthru
    _
  // Predicated region
  $region34: #{simple_block_forward.7} parent=0 // pred_check
    _
  $region35: #{simple_block_forward.7} parent=0 // pred_check_branch
    %337 = sbr.rel (0) target = $region37
  $region36: #{simple_block_forward.7} parent=0 // pred_region
    _
  $region37: #{simple_block_forward.7} parent=0 // pred_fallthru
    _

// kernel: simple_block_forward.6
$region0: #{simple_block_forward.6}
  #allocation0 [shape = 'u32[]', space=smem, size = 0x4, offset = 0x4, fixed_abs, tag = 'smem constant byte address 0x4 - core index']
  #allocation1 [shape = 'u32[144,128]{1,0:T(1,128)}', space=vmem, size = 0x12000, scoped, tag = 'internal scratch']
  %s0 = inlined_call_operand.vmem [shape: f32[128,128], index: 0, kind: input, shape index: {}]
  %s1 = inlined_call_operand.vmem [shape: f32[1,128], index: 1, kind: input, shape index: {}]
  %s2 = inlined_call_operand.vmem [shape: f32[1,128], index: 2, kind: input, shape index: {}]
  %s3 = inlined_call_operand.vmem [shape: f32[128,128], index: 3, kind: output, shape index: {}]
  %s4 = sld [smem:[#allocation0]]
  $region22: #{simple_block_forward.6} parent=0
    _
  %s6 = ssub.s32 1, %s4
  %s7 = scalar_select 0, %s6, %s4
  // Predicated region
  $region2: #{simple_block_forward.6} parent=0 // pred_check
    _
  $region3: #{simple_block_forward.6} parent=0 // pred_check_branch
    %9 = sbr.rel (0) target = $region5
  $region4: #{simple_block_forward.6} parent=0 // pred_region
    _
  $region5: #{simple_block_forward.6} parent=0 // pred_fallthru
    _
  // Predicated region
  $region6: #{simple_block_forward.6} parent=0 // pred_check
    _
  $region7: #{simple_block_forward.6} parent=0 // pred_check_branch
    %11 = sbr.rel (0) target = $region9
  $region8: #{simple_block_forward.6} parent=0 // pred_region
    _
  $region9: #{simple_block_forward.6} parent=0 // pred_fallthru
    _
  // Predicated region
  $region10: #{simple_block_forward.6} parent=0 // pred_check
    _
  $region11: #{simple_block_forward.6} parent=0 // pred_check_branch
    %13 = sbr.rel (0) target = $region13
  $region12: #{simple_block_forward.6} parent=0 // pred_region
    _
  $region13: #{simple_block_forward.6} parent=0 // pred_fallthru
    _
  %v14 = vld [vmem:[%s0] sm:$0xff]
  %v15 = vld [vmem:[%s0 + $0x8] sm:$0xff]
  %v16 = vld [vmem:[%s0 + $0x10] sm:$0xff]
  %v17 = vld [vmem:[%s0 + $0x18] sm:$0xff]
  %v18 = vld [vmem:[%s0 + $0x20] sm:$0xff]
  %v19 = vld [vmem:[%s0 + $0x28] sm:$0xff]
  %v20 = vld [vmem:[%s0 + $0x30] sm:$0xff]
  %v21 = vld [vmem:[%s0 + $0x38] sm:$0xff]
  %v22 = vld [vmem:[%s0 + $0x40] sm:$0xff]
  %v23 = vld [vmem:[%s0 + $0x48] sm:$0xff]
  %v24 = vld [vmem:[%s0 + $0x50] sm:$0xff]
  %v25 = vld [vmem:[%s0 + $0x58] sm:$0xff]
  %v26 = vld [vmem:[%s0 + $0x60] sm:$0xff]
  %v27 = vld [vmem:[%s0 + $0x68] sm:$0xff]
  %v28 = vld [vmem:[%s0 + $0x70] sm:$0xff]
  %v29 = vld [vmem:[%s0 + $0x78] sm:$0xff]
  %v30 = vld [vmem:[%s1] sm:$0x1]
  %v32 = vlaneseq
  %v33 = vshrl.u32 %v32, 7
  %v34 = vsub.s32 0, %v33
  %v35 = vrot.slane %v30, %v34
  %v37 = vmul.f32 %v14, %v35
  %v38 = vmul.f32 %v15, %v35
  %v39 = vmul.f32 %v16, %v35
  %v40 = vmul.f32 %v17, %v35
  %v41 = vmul.f32 %v18, %v35
  %v42 = vmul.f32 %v19, %v35
  %v43 = vmul.f32 %v20, %v35
  %v44 = vmul.f32 %v21, %v35
  %v45 = vmul.f32 %v22, %v35
  %v46 = vmul.f32 %v23, %v35
  %v47 = vmul.f32 %v24, %v35
  %v48 = vmul.f32 %v25, %v35
  %v49 = vmul.f32 %v26, %v35
  %v50 = vmul.f32 %v27, %v35
  %v51 = vmul.f32 %v28, %v35
  %v52 = vmul.f32 %v29, %v35
  %v53 = vld [vmem:[%s2] sm:$0x1]
  %v55 = vlaneseq
  %v56 = vshrl.u32 %v55, 7
  %v57 = vsub.s32 0, %v56
  %v58 = vrot.slane %v53, %v57
  %v60 = vadd.f32 %v37, %v58
  %v61 = vadd.f32 %v38, %v58
  %v62 = vadd.f32 %v39, %v58
  %v63 = vadd.f32 %v40, %v58
  %v64 = vadd.f32 %v41, %v58
  %v65 = vadd.f32 %v42, %v58
  %v66 = vadd.f32 %v43, %v58
  %v67 = vadd.f32 %v44, %v58
  %v68 = vadd.f32 %v45, %v58
  %v69 = vadd.f32 %v46, %v58
  %v70 = vadd.f32 %v47, %v58
  %v71 = vadd.f32 %v48, %v58
  %v72 = vadd.f32 %v49, %v58
  %v73 = vadd.f32 %v50, %v58
  %v74 = vadd.f32 %v51, %v58
  %v75 = vadd.f32 %v52, %v58
  %v76 = vmax.f32 %v60, 0.0
  %v77 = vmax.f32 %v61, 0.0
  %v78 = vmax.f32 %v62, 0.0
  %v79 = vmax.f32 %v63, 0.0
  %v80 = vmax.f32 %v64, 0.0
  %v81 = vmax.f32 %v65, 0.0
  %v82 = vmax.f32 %v66, 0.0
  %v83 = vmax.f32 %v67, 0.0
  %v84 = vmax.f32 %v68, 0.0
  %v85 = vmax.f32 %v69, 0.0
  %v86 = vmax.f32 %v70, 0.0
  %v87 = vmax.f32 %v71, 0.0
  %v88 = vmax.f32 %v72, 0.0
  %v89 = vmax.f32 %v73, 0.0
  %v90 = vmax.f32 %v74, 0.0
  %v91 = vmax.f32 %v75, 0.0
  %92 = vst [vmem:[%s3] sm:$0xff] %v76
  %93 = vst [vmem:[%s3 + $0x8] sm:$0xff] %v77
  %94 = vst [vmem:[%s3 + $0x10] sm:$0xff] %v78
  %95 = vst [vmem:[%s3 + $0x18] sm:$0xff] %v79
  %96 = vst [vmem:[%s3 + $0x20] sm:$0xff] %v80
  %97 = vst [vmem:[%s3 + $0x28] sm:$0xff] %v81
  %98 = vst [vmem:[%s3 + $0x30] sm:$0xff] %v82
  %99 = vst [vmem:[%s3 + $0x38] sm:$0xff] %v83
  %100 = vst [vmem:[%s3 + $0x40] sm:$0xff] %v84
  %101 = vst [vmem:[%s3 + $0x48] sm:$0xff] %v85
  %102 = vst [vmem:[%s3 + $0x50] sm:$0xff] %v86
  %103 = vst [vmem:[%s3 + $0x58] sm:$0xff] %v87
  %104 = vst [vmem:[%s3 + $0x60] sm:$0xff] %v88
  %105 = vst [vmem:[%s3 + $0x68] sm:$0xff] %v89
  %106 = vst [vmem:[%s3 + $0x70] sm:$0xff] %v90
  %107 = vst [vmem:[%s3 + $0x78] sm:$0xff] %v91
  // Predicated region
  $region14: #{simple_block_forward.6} parent=0 // pred_check
    _
  $region15: #{simple_block_forward.6} parent=0 // pred_check_branch
    %109 = sbr.rel (0) target = $region17
  $region16: #{simple_block_forward.6} parent=0 // pred_region
    _
  $region17: #{simple_block_forward.6} parent=0 // pred_fallthru
    _
  // Predicated region
  $region18: #{simple_block_forward.6} parent=0 // pred_check
    _
  $region19: #{simple_block_forward.6} parent=0 // pred_check_branch
    %111 = sbr.rel (0) target = $region21
  $region20: #{simple_block_forward.6} parent=0 // pred_region
    _
  $region21: #{simple_block_forward.6} parent=0 // pred_fallthru
    _

// kernel: simple_block_forward.9
$region0: #{simple_block_forward.9}
  #allocation0 [shape = 'u32[]', space=smem, size = 0x4, offset = 0x4, fixed_abs, tag = 'smem constant byte address 0x4 - core index']
  #allocation1 [shape = 'u32[144,128]{1,0:T(1,128)}', space=vmem, size = 0x12000, scoped, tag = 'internal scratch']
  %s0 = inlined_call_operand.vmem [shape: f32[128,128], index: 0, kind: input, shape index: {}]
  %s1 = inlined_call_operand.vmem [shape: f32[128,128], index: 1, kind: input, shape index: {}]
  %s2 = inlined_call_operand.vmem [shape: f32[1,128], index: 2, kind: input, shape index: {}]
  %s3 = inlined_call_operand.vmem [shape: f32[1,128], index: 3, kind: input, shape index: {}]
  %s4 = inlined_call_operand.vmem [shape: f32[1,128], index: 4, kind: input, shape index: {}]
  %s5 = inlined_call_operand.vmem [shape: f32[1,128], index: 5, kind: input, shape index: {}]
  %s6 = inlined_call_operand.vmem [shape: f32[128,128], index: 6, kind: output, shape index: {}]
  %s7 = sld [smem:[#allocation0]]
  $region34: #{simple_block_forward.9} parent=0
    _
  %s9 = ssub.s32 1, %s7
  %s10 = scalar_select 0, %s9, %s7
  // Predicated region
  $region2: #{simple_block_forward.9} parent=0 // pred_check
    _
  $region3: #{simple_block_forward.9} parent=0 // pred_check_branch
    %12 = sbr.rel (0) target = $region5
  $region4: #{simple_block_forward.9} parent=0 // pred_region
    _
  $region5: #{simple_block_forward.9} parent=0 // pred_fallthru
    _
  // Predicated region
  $region6: #{simple_block_forward.9} parent=0 // pred_check
    _
  $region7: #{simple_block_forward.9} parent=0 // pred_check_branch
    %14 = sbr.rel (0) target = $region9
  $region8: #{simple_block_forward.9} parent=0 // pred_region
    _
  $region9: #{simple_block_forward.9} parent=0 // pred_fallthru
    _
  // Predicated region
  $region10: #{simple_block_forward.9} parent=0 // pred_check
    _
  $region11: #{simple_block_forward.9} parent=0 // pred_check_branch
    %16 = sbr.rel (0) target = $region13
  $region12: #{simple_block_forward.9} parent=0 // pred_region
    _
  $region13: #{simple_block_forward.9} parent=0 // pred_fallthru
    _
  // Predicated region
  $region14: #{simple_block_forward.9} parent=0 // pred_check
    _
  $region15: #{simple_block_forward.9} parent=0 // pred_check_branch
    %18 = sbr.rel (0) target = $region17
  $region16: #{simple_block_forward.9} parent=0 // pred_region
    _
  $region17: #{simple_block_forward.9} parent=0 // pred_fallthru
    _
  // Predicated region
  $region18: #{simple_block_forward.9} parent=0 // pred_check
    _
  $region19: #{simple_block_forward.9} parent=0 // pred_check_branch
    %20 = sbr.rel (0) target = $region21
  $region20: #{simple_block_forward.9} parent=0 // pred_region
    _
  $region21: #{simple_block_forward.9} parent=0 // pred_fallthru
    _
  // Predicated region
  $region22: #{simple_block_forward.9} parent=0 // pred_check
    _
  $region23: #{simple_block_forward.9} parent=0 // pred_check_branch
    %22 = sbr.rel (0) target = $region25
  $region24: #{simple_block_forward.9} parent=0 // pred_region
    _
  $region25: #{simple_block_forward.9} parent=0 // pred_fallthru
    _
  %v23 = vld [vmem:[%s0] sm:$0xff]
  %v24 = vld [vmem:[%s0 + $0x8] sm:$0xff]
  %v25 = vld [vmem:[%s0 + $0x10] sm:$0xff]
  %v26 = vld [vmem:[%s0 + $0x18] sm:$0xff]
  %v27 = vld [vmem:[%s0 + $0x20] sm:$0xff]
  %v28 = vld [vmem:[%s0 + $0x28] sm:$0xff]
  %v29 = vld [vmem:[%s0 + $0x30] sm:$0xff]
  %v30 = vld [vmem:[%s0 + $0x38] sm:$0xff]
  %v31 = vld [vmem:[%s0 + $0x40] sm:$0xff]
  %v32 = vld [vmem:[%s0 + $0x48] sm:$0xff]
  %v33 = vld [vmem:[%s0 + $0x50] sm:$0xff]
  %v34 = vld [vmem:[%s0 + $0x58] sm:$0xff]
  %v35 = vld [vmem:[%s0 + $0x60] sm:$0xff]
  %v36 = vld [vmem:[%s0 + $0x68] sm:$0xff]
  %v37 = vld [vmem:[%s0 + $0x70] sm:$0xff]
  %v38 = vld [vmem:[%s0 + $0x78] sm:$0xff]
  %v39 = vld [vmem:[%s2] sm:$0x1]
  %v41 = vlaneseq
  %v42 = vshrl.u32 %v41, 7
  %v43 = vsub.s32 0, %v42
  %v44 = vrot.slane %v39, %v43
  %v46 = vmul.f32 %v23, %v44
  %v47 = vmul.f32 %v24, %v44
  %v48 = vmul.f32 %v25, %v44
  %v49 = vmul.f32 %v26, %v44
  %v50 = vmul.f32 %v27, %v44
  %v51 = vmul.f32 %v28, %v44
  %v52 = vmul.f32 %v29, %v44
  %v53 = vmul.f32 %v30, %v44
  %v54 = vmul.f32 %v31, %v44
  %v55 = vmul.f32 %v32, %v44
  %v56 = vmul.f32 %v33, %v44
  %v57 = vmul.f32 %v34, %v44
  %v58 = vmul.f32 %v35, %v44
  %v59 = vmul.f32 %v36, %v44
  %v60 = vmul.f32 %v37, %v44
  %v61 = vmul.f32 %v38, %v44
  %v62 = vld [vmem:[%s3] sm:$0x1]
  %v64 = vlaneseq
  %v65 = vshrl.u32 %v64, 7
  %v66 = vsub.s32 0, %v65
  %v67 = vrot.slane %v62, %v66
  %v69 = vadd.f32 %v46, %v67
  %v70 = vadd.f32 %v47, %v67
  %v71 = vadd.f32 %v48, %v67
  %v72 = vadd.f32 %v49, %v67
  %v73 = vadd.f32 %v50, %v67
  %v74 = vadd.f32 %v51, %v67
  %v75 = vadd.f32 %v52, %v67
  %v76 = vadd.f32 %v53, %v67
  %v77 = vadd.f32 %v54, %v67
  %v78 = vadd.f32 %v55, %v67
  %v79 = vadd.f32 %v56, %v67
  %v80 = vadd.f32 %v57, %v67
  %v81 = vadd.f32 %v58, %v67
  %v82 = vadd.f32 %v59, %v67
  %v83 = vadd.f32 %v60, %v67
  %v84 = vadd.f32 %v61, %v67
  %v85 = vld [vmem:[%s1] sm:$0xff]
  %v86 = vld [vmem:[%s1 + $0x8] sm:$0xff]
  %v87 = vld [vmem:[%s1 + $0x10] sm:$0xff]
  %v88 = vld [vmem:[%s1 + $0x18] sm:$0xff]
  %v89 = vld [vmem:[%s1 + $0x20] sm:$0xff]
  %v90 = vld [vmem:[%s1 + $0x28] sm:$0xff]
  %v91 = vld [vmem:[%s1 + $0x30] sm:$0xff]
  %v92 = vld [vmem:[%s1 + $0x38] sm:$0xff]
  %v93 = vld [vmem:[%s1 + $0x40] sm:$0xff]
  %v94 = vld [vmem:[%s1 + $0x48] sm:$0xff]
  %v95 = vld [vmem:[%s1 + $0x50] sm:$0xff]
  %v96 = vld [vmem:[%s1 + $0x58] sm:$0xff]
  %v97 = vld [vmem:[%s1 + $0x60] sm:$0xff]
  %v98 = vld [vmem:[%s1 + $0x68] sm:$0xff]
  %v99 = vld [vmem:[%s1 + $0x70] sm:$0xff]
  %v100 = vld [vmem:[%s1 + $0x78] sm:$0xff]
  %v101 = vld [vmem:[%s4] sm:$0x1]
  %v103 = vlaneseq
  %v104 = vshrl.u32 %v103, 7
  %v105 = vsub.s32 0, %v104
  %v106 = vrot.slane %v101, %v105
  %v108 = vmul.f32 %v85, %v106
  %v109 = vmul.f32 %v86, %v106
  %v110 = vmul.f32 %v87, %v106
  %v111 = vmul.f32 %v88, %v106
  %v112 = vmul.f32 %v89, %v106
  %v113 = vmul.f32 %v90, %v106
  %v114 = vmul.f32 %v91, %v106
  %v115 = vmul.f32 %v92, %v106
  %v116 = vmul.f32 %v93, %v106
  %v117 = vmul.f32 %v94, %v106
  %v118 = vmul.f32 %v95, %v106
  %v119 = vmul.f32 %v96, %v106
  %v120 = vmul.f32 %v97, %v106
  %v121 = vmul.f32 %v98, %v106
  %v122 = vmul.f32 %v99, %v106
  %v123 = vmul.f32 %v100, %v106
  %v124 = vadd.f32 %v69, %v108
  %v125 = vadd.f32 %v70, %v109
  %v126 = vadd.f32 %v71, %v110
  %v127 = vadd.f32 %v72, %v111
  %v128 = vadd.f32 %v73, %v112
  %v129 = vadd.f32 %v74, %v113
  %v130 = vadd.f32 %v75, %v114
  %v131 = vadd.f32 %v76, %v115
  %v132 = vadd.f32 %v77, %v116
  %v133 = vadd.f32 %v78, %v117
  %v134 = vadd.f32 %v79, %v118
  %v135 = vadd.f32 %v80, %v119
  %v136 = vadd.f32 %v81, %v120
  %v137 = vadd.f32 %v82, %v121
  %v138 = vadd.f32 %v83, %v122
  %v139 = vadd.f32 %v84, %v123
  %v140 = vld [vmem:[%s5] sm:$0x1]
  %v142 = vlaneseq
  %v143 = vshrl.u32 %v142, 7
  %v144 = vsub.s32 0, %v143
  %v145 = vrot.slane %v140, %v144
  %v147 = vadd.f32 %v124, %v145
  %v148 = vadd.f32 %v125, %v145
  %v149 = vadd.f32 %v126, %v145
  %v150 = vadd.f32 %v127, %v145
  %v151 = vadd.f32 %v128, %v145
  %v152 = vadd.f32 %v129, %v145
  %v153 = vadd.f32 %v130, %v145
  %v154 = vadd.f32 %v131, %v145
  %v155 = vadd.f32 %v132, %v145
  %v156 = vadd.f32 %v133, %v145
  %v157 = vadd.f32 %v134, %v145
  %v158 = vadd.f32 %v135, %v145
  %v159 = vadd.f32 %v136, %v145
  %v160 = vadd.f32 %v137, %v145
  %v161 = vadd.f32 %v138, %v145
  %v162 = vadd.f32 %v139, %v145
  %v163 = vmax.f32 %v147, 0.0
  %v164 = vmax.f32 %v148, 0.0
  %v165 = vmax.f32 %v149, 0.0
  %v166 = vmax.f32 %v150, 0.0
  %v167 = vmax.f32 %v151, 0.0
  %v168 = vmax.f32 %v152, 0.0
  %v169 = vmax.f32 %v153, 0.0
  %v170 = vmax.f32 %v154, 0.0
  %v171 = vmax.f32 %v155, 0.0
  %v172 = vmax.f32 %v156, 0.0
  %v173 = vmax.f32 %v157, 0.0
  %v174 = vmax.f32 %v158, 0.0
  %v175 = vmax.f32 %v159, 0.0
  %v176 = vmax.f32 %v160, 0.0
  %v177 = vmax.f32 %v161, 0.0
  %v178 = vmax.f32 %v162, 0.0
  %179 = vst [vmem:[%s6] sm:$0xff] %v163
  %180 = vst [vmem:[%s6 + $0x8] sm:$0xff] %v164
  %181 = vst [vmem:[%s6 + $0x10] sm:$0xff] %v165
  %182 = vst [vmem:[%s6 + $0x18] sm:$0xff] %v166
  %183 = vst [vmem:[%s6 + $0x20] sm:$0xff] %v167
  %184 = vst [vmem:[%s6 + $0x28] sm:$0xff] %v168
  %185 = vst [vmem:[%s6 + $0x30] sm:$0xff] %v169
  %186 = vst [vmem:[%s6 + $0x38] sm:$0xff] %v170
  %187 = vst [vmem:[%s6 + $0x40] sm:$0xff] %v171
  %188 = vst [vmem:[%s6 + $0x48] sm:$0xff] %v172
  %189 = vst [vmem:[%s6 + $0x50] sm:$0xff] %v173
  %190 = vst [vmem:[%s6 + $0x58] sm:$0xff] %v174
  %191 = vst [vmem:[%s6 + $0x60] sm:$0xff] %v175
  %192 = vst [vmem:[%s6 + $0x68] sm:$0xff] %v176
  %193 = vst [vmem:[%s6 + $0x70] sm:$0xff] %v177
  %194 = vst [vmem:[%s6 + $0x78] sm:$0xff] %v178
  // Predicated region
  $region26: #{simple_block_forward.9} parent=0 // pred_check
    _
  $region27: #{simple_block_forward.9} parent=0 // pred_check_branch
    %196 = sbr.rel (0) target = $region29
  $region28: #{simple_block_forward.9} parent=0 // pred_region
    _
  $region29: #{simple_block_forward.9} parent=0 // pred_fallthru
    _
  // Predicated region
  $region30: #{simple_block_forward.9} parent=0 // pred_check
    _
  $region31: #{simple_block_forward.9} parent=0 // pred_check_branch
    %198 = sbr.rel (0) target = $region33
  $region32: #{simple_block_forward.9} parent=0 // pred_region
    _
  $region33: #{simple_block_forward.9} parent=0 // pred_fallthru
    _

</llo_original>
